<compile_context>
chip_gen: v6e
topology: v6e:2x2x1
jax: 0.10.0
libtpu: 0.0.40
codegen_flags: <defaults>
</compile_context>

<pallas_src>
import functools

import jax
import jax.numpy as jnp
from jax import lax
from jax.experimental import pallas as pl
from jax.experimental.pallas import tpu as pltpu

# Full-precision f32 matmuls for both the XLA reference and the in-kernel dots.
jax.config.update("jax_default_matmul_precision", "highest")


def _round_up(x, m):
    return ((x + m - 1) // m) * m


def _actor_kernel(s_ref, w1t_ref, b1_ref, w2t_ref, b2_ref, out_ref, *, clamp):
    # s_ref: (tb, num_inputs) batch-major observation tile.
    # Everything downstream is feature-major (batch on the 128-lane axis).
    s_blk = s_ref[...]

    # hT[h, b] = sum_f w1t[h, f] * s[b, f]  ==  (s @ W1)^T
    # Expressed as an A @ B^T contraction so the MXU consumes the batch-major
    # block directly (no standalone transpose of the lane-sparse (tb, 4) tile).
    hT = lax.dot_general(
        w1t_ref[...], s_blk,
        dimension_numbers=(((1,), (1,)), ((), ())),
        preferred_element_type=jnp.float32,
    )                                                    # [hidden, tb]
    hT = jnp.maximum(hT + b1_ref[...], 0.0)              # bias + ReLU, lane-dense

    logits = jnp.dot(w2t_ref[...], hT,
                     preferred_element_type=jnp.float32) + b2_ref[...]  # [na, tb]

    num_actions = logits.shape[0]
    if num_actions == 2:
        # Explicit 2-row softmax: plain VPU ops, no sublane reduce over an
        # 8-sublane-padded tile.
        m = jnp.maximum(logits[0:1, :], logits[1:2, :])
        e = jnp.exp(logits - m)
        denom = e[0:1, :] + e[1:2, :]
    else:
        m = jnp.max(logits, axis=0, keepdims=True)
        e = jnp.exp(logits - m)
        denom = jnp.sum(e, axis=0, keepdims=True)

    probs = e / denom                                    # exact normalization
    if clamp:  # torch.distributions.utils.clamp_probs
        eps = jnp.finfo(jnp.float32).eps
        probs = jnp.clip(probs, eps, 1.0 - eps)
    out_ref[...] = probs.astype(out_ref.dtype)


def prepare_params(w1, b1, w2, b2):
    """One-time layout prep (per parameter update, NOT per forward call)."""
    w1t = jnp.transpose(w1).astype(jnp.float32)          # [hidden, num_inputs]
    w2t = jnp.transpose(w2).astype(jnp.float32)          # [num_actions, hidden]
    b1c = jnp.reshape(b1, (-1, 1)).astype(jnp.float32)   # column biases broadcast
    b2c = jnp.reshape(b2, (-1, 1)).astype(jnp.float32)   #   over the lane (batch) axis
    return w1t, b1c, w2t, b2c


def actor_discrete_forward(s, params, *, clamp=False, tile_b=16384):
    """pi(a|s) = softmax(MLP(s)).  s: [B, num_inputs]  ->  [B, num_actions] (f32)."""
    w1t, b1c, w2t, b2c = params
    B, num_inputs = s.shape
    hidden, num_actions = w1t.shape[0], w2t.shape[0]

    # Lane-aligned batch tile.  Keep >= 2 grid steps whenever B allows it so
    # the "parallel" batch axis can feed both TensorCores on v7x.
    b_aligned = _round_up(B, 128)
    tb = min(tile_b, b_aligned)
    if b_aligned > 128 and b_aligned // tb < 2:
        tb = _round_up((b_aligned + 1) // 2, 128)
    tb = max(tb, 128)
    n_tiles = pl.cdiv(B, tb)                  # ragged last tile -> masked by Pallas

    kernel = functools.partial(_actor_kernel, clamp=clamp)

    out_t = pl.pallas_call(
        kernel,
        out_shape=jax.ShapeDtypeStruct((num_actions, B), jnp.float32),
        grid=(n_tiles,),
        in_specs=[
            pl.BlockSpec((tb, num_inputs), lambda i: (i, 0)),       # s: batch-major tiles
            pl.BlockSpec((hidden, num_inputs), lambda i: (0, 0)),   # weights VMEM-resident
            pl.BlockSpec((hidden, 1), lambda i: (0, 0)),
            pl.BlockSpec((num_actions, hidden), lambda i: (0, 0)),
            pl.BlockSpec((num_actions, 1), lambda i: (0, 0)),
        ],
        out_specs=pl.BlockSpec((num_actions, tb), lambda i: (0, i)),  # lane-dense output
        compiler_params=pltpu.CompilerParams(
            dimension_semantics=("parallel",),   # shard batch tiles across TCs (v7x)
            vmem_limit_bytes=32 * 1024 * 1024,   # legal on v5e/v6e/v7x; raise with tile_b
        ),
    )(s, w1t, b1c, w2t, b2c)

    # Tiny layout flip back to the module's batch-major contract; a
    # feature-major consumer could use out_t directly and skip this pass.
    return jnp.transpose(out_t)


def init_params(key, num_inputs, num_actions, hidden):
    """torch.nn.Linear-style init (uniform +-1/sqrt(fan_in)); x @ W + b convention."""
    k1, k2, k3, k4 = jax.random.split(key, 4)
    bound1 = 1.0 / jnp.sqrt(num_inputs)
    bound2 = 1.0 / jnp.sqrt(hidden)
    w1 = jax.random.uniform(k1, (num_inputs, hidden), jnp.float32, -bound1, bound1)
    b1 = jax.random.uniform(k2, (hidden,), jnp.float32, -bound1, bound1)
    w2 = jax.random.uniform(k3, (hidden, num_actions), jnp.float32, -bound2, bound2)
    b2 = jax.random.uniform(k4, (num_actions,), jnp.float32, -bound2, bound2)
    return w1, b1, w2, b2


def reference_forward(s, w1, b1, w2, b2):
    """Pure-JAX reference of the same forward pass (for a sanity check)."""
    h = jnp.maximum(s @ w1 + b1, 0.0)
    logits = h @ w2 + b2
    return jax.nn.softmax(logits, axis=-1)


if __name__ == "__main__":
    # CartPole-v1: observation dim 4, 2 discrete actions; hidden = 32.
    num_inputs, num_actions, hidden = 4, 2, 32
    batch = 8

    key = jax.random.PRNGKey(0)
    k_params, k_x = jax.random.split(key)
    w1, b1, w2, b2 = init_params(k_params, num_inputs, num_actions, hidden)
    params = prepare_params(w1, b1, w2, b2)          # hoisted out of the forward
    s = jax.random.normal(k_x, (batch, num_inputs), jnp.float32)

    pi = actor_discrete_forward(s, params)
    pi = jax.block_until_ready(pi)

    ref = reference_forward(s, w1, b1, w2, b2)
    assert pi.shape == (batch, num_actions)
    # Exact softmax normalization -> tight tolerances restored.
    assert bool(jnp.allclose(jnp.sum(pi, axis=-1), 1.0, atol=1e-5))
    assert bool(jnp.allclose(pi, ref, atol=1e-4, rtol=1e-4))

    print("KERNEL_OK")
</pallas_src>

<mosaic_0001>
module attributes {stable_mosaic.version = 11 : i64} {
  func.func @_actor_kernel(%arg0: i32, %arg1: memref<128x4xf32, #tpu.memory_space<vmem>>, %arg2: memref<32x4xf32, #tpu.memory_space<vmem>>, %arg3: memref<32x1xf32, #tpu.memory_space<vmem>>, %arg4: memref<2x32xf32, #tpu.memory_space<vmem>>, %arg5: memref<2x1xf32, #tpu.memory_space<vmem>>, %arg6: memref<2x128xf32, #tpu.memory_space<vmem>>) attributes {dimension_semantics = [#tpu.dimension_semantics<parallel>], iteration_bounds = array<i64: 1>, scalar_prefetch = 0 : i64, scratch_operands = 0 : i64, tpu.core_type = #tpu.core_type<tc>, window_params = [{transform_indices = @transform_0, window_bounds = array<i64: 128, 4>}, {pipeline_mode = #tpu.pipeline_mode<synchronous>, transform_indices = @transform_1, window_bounds = array<i64: 32, 4>}, {pipeline_mode = #tpu.pipeline_mode<synchronous>, transform_indices = @transform_2, window_bounds = array<i64: 32, 1>}, {pipeline_mode = #tpu.pipeline_mode<synchronous>, transform_indices = @transform_3, window_bounds = array<i64: 2, 32>}, {pipeline_mode = #tpu.pipeline_mode<synchronous>, transform_indices = @transform_4, window_bounds = array<i64: 2, 1>}, {transform_indices = @transform_5, window_bounds = array<i64: 2, 128>}]} {
    %c0 = arith.constant 0 : index
    %c0_0 = arith.constant 0 : index
    %0 = vector.load %arg1[%c0, %c0_0] : memref<128x4xf32, #tpu.memory_space<vmem>>, vector<128x4xf32>
    %c0_1 = arith.constant 0 : index
    %c0_2 = arith.constant 0 : index
    %1 = vector.load %arg2[%c0_1, %c0_2] : memref<32x4xf32, #tpu.memory_space<vmem>>, vector<32x4xf32>
    %cst = arith.constant dense<0.000000e+00> : vector<32x128xf32>
    %2 = tpu.matmul %1, %0, %cst {dimension_numbers = #tpu.dot_dimension_numbers<[1], [1], [0], [0], [0, 0, 1, 0], [], []>, precision = #tpu.contract_precision<fp32>} : vector<32x4xf32>, vector<128x4xf32>, vector<32x128xf32> -> vector<32x128xf32>
    %c0_3 = arith.constant 0 : index
    %c0_4 = arith.constant 0 : index
    %3 = vector.load %arg3[%c0_3, %c0_4] : memref<32x1xf32, #tpu.memory_space<vmem>>, vector<32x1xf32>
    %4 = vector.broadcast %3 : vector<32x1xf32> to vector<32x128xf32>
    %5 = arith.addf %2, %4 : vector<32x128xf32>
    %cst_5 = arith.constant 0.000000e+00 : f32
    %6 = vector.broadcast %cst_5 : f32 to vector<32x128xf32>
    %7 = arith.maximumf %5, %6 : vector<32x128xf32>
    %c0_6 = arith.constant 0 : index
    %c0_7 = arith.constant 0 : index
    %8 = vector.load %arg4[%c0_6, %c0_7] : memref<2x32xf32, #tpu.memory_space<vmem>>, vector<2x32xf32>
    %cst_8 = arith.constant dense<0.000000e+00> : vector<2x128xf32>
    %9 = tpu.matmul %8, %7, %cst_8 {dimension_numbers = #tpu.dot_dimension_numbers<[1], [0], [0], [1], [0, 0, 1, 1], [], []>, precision = #tpu.contract_precision<fp32>} : vector<2x32xf32>, vector<32x128xf32>, vector<2x128xf32> -> vector<2x128xf32>
    %c0_9 = arith.constant 0 : index
    %c0_10 = arith.constant 0 : index
    %10 = vector.load %arg5[%c0_9, %c0_10] : memref<2x1xf32, #tpu.memory_space<vmem>>, vector<2x1xf32>
    %11 = vector.broadcast %10 : vector<2x1xf32> to vector<2x128xf32>
    %12 = arith.addf %9, %11 : vector<2x128xf32>
    %13 = vector.extract_strided_slice %12 {offsets = [0, 0], sizes = [1, 128], strides = [1, 1]} : vector<2x128xf32> to vector<1x128xf32>
    %14 = vector.extract_strided_slice %12 {offsets = [1, 0], sizes = [1, 128], strides = [1, 1]} : vector<2x128xf32> to vector<1x128xf32>
    %15 = arith.maximumf %13, %14 : vector<1x128xf32>
    %16 = vector.broadcast %15 : vector<1x128xf32> to vector<2x128xf32>
    %17 = arith.subf %12, %16 : vector<2x128xf32>
    %18 = math.exp %17 : vector<2x128xf32>
    %19 = vector.extract_strided_slice %18 {offsets = [0, 0], sizes = [1, 128], strides = [1, 1]} : vector<2x128xf32> to vector<1x128xf32>
    %20 = vector.extract_strided_slice %18 {offsets = [1, 0], sizes = [1, 128], strides = [1, 1]} : vector<2x128xf32> to vector<1x128xf32>
    %21 = arith.addf %19, %20 : vector<1x128xf32>
    %22 = vector.broadcast %21 : vector<1x128xf32> to vector<2x128xf32>
    %23 = arith.divf %18, %22 : vector<2x128xf32>
    %c0_11 = arith.constant 0 : index
    %c0_12 = arith.constant 0 : index
    %24 = vector.load %arg6[%c0_11, %c0_12] : memref<2x128xf32, #tpu.memory_space<vmem>>, vector<2x128xf32>
    tpu.vector_store %arg6[%c0_11, %c0_12], %23 {strides = array<i32>} : memref<2x128xf32, #tpu.memory_space<vmem>>, vector<2x128xf32>,
    return
  }
  func.func @transform_0(%arg0: i32) -> (i32, i32) {
    %c0_i32 = arith.constant 0 : i32
    %c0_i32_0 = arith.constant 0 : i32
    return %arg0, %c0_i32 : i32, i32
  }
  func.func @transform_1(%arg0: i32) -> (i32, i32) {
    %c0_i32 = arith.constant 0 : i32
    %c0_i32_0 = arith.constant 0 : i32
    %c0_i32_1 = arith.constant 0 : i32
    return %c0_i32, %c0_i32_0 : i32, i32
  }
  func.func @transform_2(%arg0: i32) -> (i32, i32) {
    %c0_i32 = arith.constant 0 : i32
    %c0_i32_0 = arith.constant 0 : i32
    %c0_i32_1 = arith.constant 0 : i32
    return %c0_i32, %c0_i32_0 : i32, i32
  }
  func.func @transform_3(%arg0: i32) -> (i32, i32) {
    %c0_i32 = arith.constant 0 : i32
    %c0_i32_0 = arith.constant 0 : i32
    %c0_i32_1 = arith.constant 0 : i32
    return %c0_i32, %c0_i32_0 : i32, i32
  }
  func.func @transform_4(%arg0: i32) -> (i32, i32) {
    %c0_i32 = arith.constant 0 : i32
    %c0_i32_0 = arith.constant 0 : i32
    %c0_i32_1 = arith.constant 0 : i32
    return %c0_i32, %c0_i32_0 : i32, i32
  }
  func.func @transform_5(%arg0: i32) -> (i32, i32) {
    %c0_i32 = arith.constant 0 : i32
    %c0_i32_0 = arith.constant 0 : i32
    return %c0_i32, %arg0 : i32, i32
  }
}

</mosaic_0001>

<llo_original>
// kernel: tpu_custom_call.1
$region0: #{tpu_custom_call.1}
  #allocation0 [shape = 'u32[]', space=smem, size = 0x4, offset = 0x4, fixed_abs, tag = 'smem constant byte address 0x4 - core index']
  #allocation1 [shape = 'u32[144,128]{1,0:T(1,128)}', space=vmem, size = 0x12000, scoped, tag = 'internal scratch']
  %s0 = inlined_call_operand.vmem [shape: f32[8,4], index: 0, kind: input, shape index: {}]
  %s1 = inlined_call_operand.vmem [shape: f32[32,4], index: 1, kind: input, shape index: {}]
  %s2 = inlined_call_operand.vmem [shape: f32[32,1], index: 2, kind: input, shape index: {}]
  %s3 = inlined_call_operand.vmem [shape: f32[2,32], index: 3, kind: input, shape index: {}]
  %s4 = inlined_call_operand.vmem [shape: f32[2,1], index: 4, kind: input, shape index: {}]
  %s5 = inlined_call_operand.hbm [shape: f32[2,8], index: 5, kind: output, shape index: {}]
  %s6 = sld [smem:[#allocation0]]
  $region30: #{tpu_custom_call.1} parent=0
    _
  %s8 = ssub.s32 1, %s6
  %s9 = scalar_select 0, %s8, %s6
  $region1: #{tpu_custom_call.1} parent=0
    #allocation2 [shape = 'u8[1024]{0}', space=vmem, size = 0x400, scoped, tag = 'output window, operand 0, single buffered']
    #allocation3 [shape = 's32[1]{0}', space=sflag, size = 0x4, scoped, tag = 'scoped memory for tpu_custom_call.1']
    %10 = vsyncpa [#allocation3], 0
    // Predicated region
    $region2: #{tpu_custom_call.1} parent=1 // pred_check
      _
    $region3: #{tpu_custom_call.1} parent=1 // pred_check_branch
      %12 = sbr.rel (0) target = $region5
    $region4: #{tpu_custom_call.1} parent=1 // pred_region
      _
    $region5: #{tpu_custom_call.1} parent=1 // pred_fallthru
      _
    // Predicated region
    $region6: #{tpu_custom_call.1} parent=1 // pred_check
      _
    $region7: #{tpu_custom_call.1} parent=1 // pred_check_branch
      %14 = sbr.rel (0) target = $region9
    $region8: #{tpu_custom_call.1} parent=1 // pred_region
      _
    $region9: #{tpu_custom_call.1} parent=1 // pred_fallthru
      _
    // Predicated region
    $region10: #{tpu_custom_call.1} parent=1 // pred_check
      _
    $region11: #{tpu_custom_call.1} parent=1 // pred_check_branch
      %16 = sbr.rel (0) target = $region13
    $region12: #{tpu_custom_call.1} parent=1 // pred_region
      _
    $region13: #{tpu_custom_call.1} parent=1 // pred_fallthru
      _
    // Predicated region
    $region14: #{tpu_custom_call.1} parent=1 // pred_check
      _
    $region15: #{tpu_custom_call.1} parent=1 // pred_check_branch
      %18 = sbr.rel (0) target = $region17
    $region16: #{tpu_custom_call.1} parent=1 // pred_region
      _
    $region17: #{tpu_custom_call.1} parent=1 // pred_fallthru
      _
    // Predicated region
    $region18: #{tpu_custom_call.1} parent=1 // pred_check
      _
    $region19: #{tpu_custom_call.1} parent=1 // pred_check_branch
      %20 = sbr.rel (0) target = $region21
    $region20: #{tpu_custom_call.1} parent=1 // pred_region
      _
    $region21: #{tpu_custom_call.1} parent=1 // pred_fallthru
      _
    %v21 = vld [vmem:[%s0] sm:$0xff]
    %v22 = vld [vmem:[%s0 + $0x8] sm:$0xff]
    %v23 = vld [vmem:[%s0 + $0x10] sm:$0xff]
    %v24 = vld [vmem:[%s0 + $0x18] sm:$0xff]
    %v25 = vld [vmem:[%s0 + $0x20] sm:$0xff]
    %v26 = vld [vmem:[%s0 + $0x28] sm:$0xff]
    %v27 = vld [vmem:[%s0 + $0x30] sm:$0xff]
    %v28 = vld [vmem:[%s0 + $0x38] sm:$0xff]
    %v29 = vld [vmem:[%s0 + $0x40] sm:$0xff]
    %v30 = vld [vmem:[%s0 + $0x48] sm:$0xff]
    %v31 = vld [vmem:[%s0 + $0x50] sm:$0xff]
    %v32 = vld [vmem:[%s0 + $0x58] sm:$0xff]
    %v33 = vld [vmem:[%s0 + $0x60] sm:$0xff]
    %v34 = vld [vmem:[%s0 + $0x68] sm:$0xff]
    %v35 = vld [vmem:[%s0 + $0x70] sm:$0xff]
    %v36 = vld [vmem:[%s0 + $0x78] sm:$0xff]
    %v37 = vld [vmem:[%s1] sm:$0xff]
    %v38 = vld [vmem:[%s1 + $0x8] sm:$0xff]
    %v39 = vld [vmem:[%s1 + $0x10] sm:$0xff]
    %v40 = vld [vmem:[%s1 + $0x18] sm:$0xff]
    %v41 = vld [vmem:[%s2] sm:$0xff]
    %v42 = vld [vmem:[%s2 + $0x8] sm:$0xff]
    %v43 = vld [vmem:[%s2 + $0x10] sm:$0xff]
    %v44 = vld [vmem:[%s2 + $0x18] sm:$0xff]
    %46 = vset.pattern.permute.xlu0 0
    %47 = vperm.xlu0 %46, %v41
    %v48 = vpop.permute.xlu0 %47
    %51 = vset.pattern.permute.xlu0 0
    %52 = vperm.xlu0 %51, %v42
    %v53 = vpop.permute.xlu0 %52
    %56 = vset.pattern.permute.xlu0 0
    %57 = vperm.xlu0 %56, %v43
    %v58 = vpop.permute.xlu0 %57
    %61 = vset.pattern.permute.xlu0 0
    %62 = vperm.xlu0 %61, %v44
    %v63 = vpop.permute.xlu0 %62
    %vm65 = vcmask 31744
    %v67 = vsel %vm65, %v37, 0
    %v70 = vsel %vm65, %v38, 0
    %v73 = vsel %vm65, %v39, 0
    %v76 = vsel %vm65, %v40, 0
    %v79 = vsel %vm65, %v21, 0
    %v82 = vsel %vm65, %v22, 0
    %v85 = vsel %vm65, %v23, 0
    %v88 = vsel %vm65, %v24, 0
    %v91 = vsel %vm65, %v25, 0
    %v94 = vsel %vm65, %v26, 0
    %v97 = vsel %vm65, %v27, 0
    %v100 = vsel %vm65, %v28, 0
    %v103 = vsel %vm65, %v29, 0
    %v106 = vsel %vm65, %v30, 0
    %v109 = vsel %vm65, %v31, 0
    %v112 = vsel %vm65, %v32, 0
    %v115 = vsel %vm65, %v33, 0
    %v118 = vsel %vm65, %v34, 0
    %v121 = vsel %vm65, %v35, 0
    %v124 = vsel %vm65, %v36, 0
    %126 = vmatprep.subr.mxu0 0.0
    %v127 = vand.u32 %v124, 4294901760
    %128 = vmatpush1.xpose.msra.mxu0 %v127
    %129 = vmatprep.subr.mxu0 0.0
    %v130 = vand.u32 %v121, 4294901760
    %131 = vmatpush1.xpose.msra.mxu0 %v130
    %132 = vmatprep.subr.mxu0 0.0
    %v133 = vand.u32 %v118, 4294901760
    %134 = vmatpush1.xpose.msra.mxu0 %v133
    %135 = vmatprep.subr.mxu0 0.0
    %v136 = vand.u32 %v115, 4294901760
    %137 = vmatpush1.xpose.msra.mxu0 %v136
    %138 = vmatprep.subr.mxu0 0.0
    %v139 = vand.u32 %v112, 4294901760
    %140 = vmatpush1.xpose.msra.mxu0 %v139
    %141 = vmatprep.subr.mxu0 0.0
    %v142 = vand.u32 %v109, 4294901760
    %143 = vmatpush1.xpose.msra.mxu0 %v142
    %144 = vmatprep.subr.mxu0 0.0
    %v145 = vand.u32 %v106, 4294901760
    %146 = vmatpush1.xpose.msra.mxu0 %v145
    %147 = vmatprep.subr.mxu0 0.0
    %v148 = vand.u32 %v103, 4294901760
    %149 = vmatpush1.xpose.msra.mxu0 %v148
    %150 = vmatprep.subr.mxu0 0.0
    %v151 = vand.u32 %v100, 4294901760
    %152 = vmatpush1.xpose.msra.mxu0 %v151
    %153 = vmatprep.subr.mxu0 0.0
    %v154 = vand.u32 %v97, 4294901760
    %155 = vmatpush1.xpose.msra.mxu0 %v154
    %156 = vmatprep.subr.mxu0 0.0
    %v157 = vand.u32 %v94, 4294901760
    %158 = vmatpush1.xpose.msra.mxu0 %v157
    %159 = vmatprep.subr.mxu0 0.0
    %v160 = vand.u32 %v91, 4294901760
    %161 = vmatpush1.xpose.msra.mxu0 %v160
    %162 = vmatprep.subr.mxu0 0.0
    %v163 = vand.u32 %v88, 4294901760
    %164 = vmatpush1.xpose.msra.mxu0 %v163
    %165 = vmatprep.subr.mxu0 0.0
    %v166 = vand.u32 %v85, 4294901760
    %167 = vmatpush1.xpose.msra.mxu0 %v166
    %168 = vmatprep.subr.mxu0 0.0
    %v169 = vand.u32 %v82, 4294901760
    %170 = vmatpush1.xpose.msra.mxu0 %v169
    %171 = vmatprep.subr.mxu0 0.0
    %v172 = vand.u32 %v79, 4294901760
    %173 = vmatpush1.xpose.msra.mxu0 %v172
    %174 = vmatprep.subr.mxu0 0.0
    %175 = vmatpush2.xpose.msra.mxu0 0.0
    %176 = vmatprep.subr.mxu0 0.0
    %177 = vmatpush2.xpose.msra.mxu0 0.0
    %178 = vmatprep.subr.mxu0 0.0
    %179 = vmatpush2.xpose.msra.mxu0 0.0
    %180 = vmatprep.subr.mxu0 0.0
    %181 = vmatpush2.xpose.msra.mxu0 0.0
    %182 = vmatprep.subr.mxu0 0.0
    %183 = vmatpush2.xpose.msra.mxu0 0.0
    %184 = vmatprep.subr.mxu0 0.0
    %185 = vmatpush2.xpose.msra.mxu0 0.0
    %186 = vmatprep.subr.mxu0 0.0
    %187 = vmatpush2.xpose.msra.mxu0 0.0
    %188 = vmatprep.subr.mxu0 0.0
    %189 = vmatpush2.xpose.msra.mxu0 0.0
    %190 = vmatprep.subr.mxu0 0.0
    %191 = vmatpush2.xpose.msra.mxu0 0.0
    %192 = vmatprep.subr.mxu0 0.0
    %193 = vmatpush2.xpose.msra.mxu0 0.0
    %194 = vmatprep.subr.mxu0 0.0
    %195 = vmatpush2.xpose.msra.mxu0 0.0
    %196 = vmatprep.subr.mxu0 0.0
    %197 = vmatpush2.xpose.msra.mxu0 0.0
    %198 = vmatprep.subr.mxu0 0.0
    %199 = vmatpush2.xpose.msra.mxu0 0.0
    %200 = vmatprep.subr.mxu0 0.0
    %201 = vmatpush2.xpose.msra.mxu0 0.0
    %202 = vmatprep.subr.mxu0 0.0
    %203 = vmatpush2.xpose.msra.mxu0 0.0
    %204 = vmatprep.subr.mxu0 0.0
    %205 = vmatpush2.xpose.msra.mxu0 0.0
    %206 = vmatprep.mubr.f32.mxu0 0.0
    %v207 = vand.u32 %v67, 4294901760
    %v208 = vsub.f32 %v67, %v207
    %v209 = vand.u32 %v208, 4294901760
    %v210 = vsub.f32 %v208, %v209
    %v211 = vand.u32 %v210, 4294901760
    %212 = vmatmul.mubr.f32.gmra.mxu0 %v211
    %v213 = vpop.f32.mrf.mxu0
    %v214 = vadd.f32 %v48, %v213
    %v215 = vpop.f32.mrf.mxu0
    %216 = vmatprep.mubr.f32.mxu0 0.0
    %v217 = vand.u32 %v70, 4294901760
    %v218 = vsub.f32 %v70, %v217
    %v219 = vand.u32 %v218, 4294901760
    %v220 = vsub.f32 %v218, %v219
    %v221 = vand.u32 %v220, 4294901760
    %222 = vmatmul.mubr.f32.gmra.mxu0 %v221
    %v223 = vpop.f32.mrf.mxu0
    %v224 = vadd.f32 %v53, %v223
    %v225 = vpop.f32.mrf.mxu0
    %226 = vmatprep.mubr.f32.mxu0 0.0
    %v227 = vand.u32 %v73, 4294901760
    %v228 = vsub.f32 %v73, %v227
    %v229 = vand.u32 %v228, 4294901760
    %v230 = vsub.f32 %v228, %v229
    %v231 = vand.u32 %v230, 4294901760
    %232 = vmatmul.mubr.f32.gmra.mxu0 %v231
    %v233 = vpop.f32.mrf.mxu0
    %v234 = vadd.f32 %v58, %v233
    %v235 = vpop.f32.mrf.mxu0
    %236 = vmatprep.mubr.f32.mxu0 0.0
    %v237 = vand.u32 %v76, 4294901760
    %v238 = vsub.f32 %v76, %v237
    %v239 = vand.u32 %v238, 4294901760
    %v240 = vsub.f32 %v238, %v239
    %v241 = vand.u32 %v240, 4294901760
    %242 = vmatmul.mubr.f32.gmra.mxu0 %v241
    %v243 = vpop.f32.mrf.mxu0
    %v244 = vadd.f32 %v63, %v243
    %v245 = vpop.f32.mrf.mxu0
    %246 = vdwg.mxu0
    %247 = vmatprep.subr.mxu0 0.0
    %v248 = vand.u32 %v124, 4294901760
    %v249 = vsub.f32 %v124, %v248
    %v250 = vand.u32 %v249, 4294901760
    %v251 = vsub.f32 %v249, %v250
    %v252 = vand.u32 %v251, 4294901760
    %253 = vmatpush1.xpose.msra.mxu0 %v252
    %254 = vmatprep.subr.mxu0 0.0
    %v255 = vand.u32 %v121, 4294901760
    %v256 = vsub.f32 %v121, %v255
    %v257 = vand.u32 %v256, 4294901760
    %v258 = vsub.f32 %v256, %v257
    %v259 = vand.u32 %v258, 4294901760
    %260 = vmatpush1.xpose.msra.mxu0 %v259
    %261 = vmatprep.subr.mxu0 0.0
    %v262 = vand.u32 %v118, 4294901760
    %v263 = vsub.f32 %v118, %v262
    %v264 = vand.u32 %v263, 4294901760
    %v265 = vsub.f32 %v263, %v264
    %v266 = vand.u32 %v265, 4294901760
    %267 = vmatpush1.xpose.msra.mxu0 %v266
    %268 = vmatprep.subr.mxu0 0.0
    %v269 = vand.u32 %v115, 4294901760
    %v270 = vsub.f32 %v115, %v269
    %v271 = vand.u32 %v270, 4294901760
    %v272 = vsub.f32 %v270, %v271
    %v273 = vand.u32 %v272, 4294901760
    %274 = vmatpush1.xpose.msra.mxu0 %v273
    %275 = vmatprep.subr.mxu0 0.0
    %v276 = vand.u32 %v112, 4294901760
    %v277 = vsub.f32 %v112, %v276
    %v278 = vand.u32 %v277, 4294901760
    %v279 = vsub.f32 %v277, %v278
    %v280 = vand.u32 %v279, 4294901760
    %281 = vmatpush1.xpose.msra.mxu0 %v280
    %282 = vmatprep.subr.mxu0 0.0
    %v283 = vand.u32 %v109, 4294901760
    %v284 = vsub.f32 %v109, %v283
    %v285 = vand.u32 %v284, 4294901760
    %v286 = vsub.f32 %v284, %v285
    %v287 = vand.u32 %v286, 4294901760
    %288 = vmatpush1.xpose.msra.mxu0 %v287
    %289 = vmatprep.subr.mxu0 0.0
    %v290 = vand.u32 %v106, 4294901760
    %v291 = vsub.f32 %v106, %v290
    %v292 = vand.u32 %v291, 4294901760
    %v293 = vsub.f32 %v291, %v292
    %v294 = vand.u32 %v293, 4294901760
    %295 = vmatpush1.xpose.msra.mxu0 %v294
    %296 = vmatprep.subr.mxu0 0.0
    %v297 = vand.u32 %v103, 4294901760
    %v298 = vsub.f32 %v103, %v297
    %v299 = vand.u32 %v298, 4294901760
    %v300 = vsub.f32 %v298, %v299
    %v301 = vand.u32 %v300, 4294901760
    %302 = vmatpush1.xpose.msra.mxu0 %v301
    %303 = vmatprep.subr.mxu0 0.0
    %v304 = vand.u32 %v100, 4294901760
    %v305 = vsub.f32 %v100, %v304
    %v306 = vand.u32 %v305, 4294901760
    %v307 = vsub.f32 %v305, %v306
    %v308 = vand.u32 %v307, 4294901760
    %309 = vmatpush1.xpose.msra.mxu0 %v308
    %310 = vmatprep.subr.mxu0 0.0
    %v311 = vand.u32 %v97, 4294901760
    %v312 = vsub.f32 %v97, %v311
    %v313 = vand.u32 %v312, 4294901760
    %v314 = vsub.f32 %v312, %v313
    %v315 = vand.u32 %v314, 4294901760
    %316 = vmatpush1.xpose.msra.mxu0 %v315
    %317 = vmatprep.subr.mxu0 0.0
    %v318 = vand.u32 %v94, 4294901760
    %v319 = vsub.f32 %v94, %v318
    %v320 = vand.u32 %v319, 4294901760
    %v321 = vsub.f32 %v319, %v320
    %v322 = vand.u32 %v321, 4294901760
    %323 = vmatpush1.xpose.msra.mxu0 %v322
    %324 = vmatprep.subr.mxu0 0.0
    %v325 = vand.u32 %v91, 4294901760
    %v326 = vsub.f32 %v91, %v325
    %v327 = vand.u32 %v326, 4294901760
    %v328 = vsub.f32 %v326, %v327
    %v329 = vand.u32 %v328, 4294901760
    %330 = vmatpush1.xpose.msra.mxu0 %v329
    %331 = vmatprep.subr.mxu0 0.0
    %v332 = vand.u32 %v88, 4294901760
    %v333 = vsub.f32 %v88, %v332
    %v334 = vand.u32 %v333, 4294901760
    %v335 = vsub.f32 %v333, %v334
    %v336 = vand.u32 %v335, 4294901760
    %337 = vmatpush1.xpose.msra.mxu0 %v336
    %338 = vmatprep.subr.mxu0 0.0
    %v339 = vand.u32 %v85, 4294901760
    %v340 = vsub.f32 %v85, %v339
    %v341 = vand.u32 %v340, 4294901760
    %v342 = vsub.f32 %v340, %v341
    %v343 = vand.u32 %v342, 4294901760
    %344 = vmatpush1.xpose.msra.mxu0 %v343
    %345 = vmatprep.subr.mxu0 0.0
    %v346 = vand.u32 %v82, 4294901760
    %v347 = vsub.f32 %v82, %v346
    %v348 = vand.u32 %v347, 4294901760
    %v349 = vsub.f32 %v347, %v348
    %v350 = vand.u32 %v349, 4294901760
    %351 = vmatpush1.xpose.msra.mxu0 %v350
    %352 = vmatprep.subr.mxu0 0.0
    %v353 = vand.u32 %v79, 4294901760
    %v354 = vsub.f32 %v79, %v353
    %v355 = vand.u32 %v354, 4294901760
    %v356 = vsub.f32 %v354, %v355
    %v357 = vand.u32 %v356, 4294901760
    %358 = vmatpush1.xpose.msra.mxu0 %v357
    %359 = vmatprep.subr.mxu0 0.0
    %360 = vmatpush2.xpose.msra.mxu0 0.0
    %361 = vmatprep.subr.mxu0 0.0
    %362 = vmatpush2.xpose.msra.mxu0 0.0
    %363 = vmatprep.subr.mxu0 0.0
    %364 = vmatpush2.xpose.msra.mxu0 0.0
    %365 = vmatprep.subr.mxu0 0.0
    %366 = vmatpush2.xpose.msra.mxu0 0.0
    %367 = vmatprep.subr.mxu0 0.0
    %368 = vmatpush2.xpose.msra.mxu0 0.0
    %369 = vmatprep.subr.mxu0 0.0
    %370 = vmatpush2.xpose.msra.mxu0 0.0
    %371 = vmatprep.subr.mxu0 0.0
    %372 = vmatpush2.xpose.msra.mxu0 0.0
    %373 = vmatprep.subr.mxu0 0.0
    %374 = vmatpush2.xpose.msra.mxu0 0.0
    %375 = vmatprep.subr.mxu0 0.0
    %376 = vmatpush2.xpose.msra.mxu0 0.0
    %377 = vmatprep.subr.mxu0 0.0
    %378 = vmatpush2.xpose.msra.mxu0 0.0
    %379 = vmatprep.subr.mxu0 0.0
    %380 = vmatpush2.xpose.msra.mxu0 0.0
    %381 = vmatprep.subr.mxu0 0.0
    %382 = vmatpush2.xpose.msra.mxu0 0.0
    %383 = vmatprep.subr.mxu0 0.0
    %384 = vmatpush2.xpose.msra.mxu0 0.0
    %385 = vmatprep.subr.mxu0 0.0
    %386 = vmatpush2.xpose.msra.mxu0 0.0
    %387 = vmatprep.subr.mxu0 0.0
    %388 = vmatpush2.xpose.msra.mxu0 0.0
    %389 = vmatprep.subr.mxu0 0.0
    %390 = vmatpush2.xpose.msra.mxu0 0.0
    %391 = vmatprep.mubr.f32.mxu0 0.0
    %v392 = vand.u32 %v67, 4294901760
    %393 = vmatmul.mubr.f32.gmra.mxu0 %v392
    %v394 = vpop.f32.mrf.mxu0
    %v395 = vadd.f32 %v214, %v394
    %v396 = vpop.f32.mrf.mxu0
    %397 = vmatprep.mubr.f32.mxu0 0.0
    %v398 = vand.u32 %v70, 4294901760
    %399 = vmatmul.mubr.f32.gmra.mxu0 %v398
    %v400 = vpop.f32.mrf.mxu0
    %v401 = vadd.f32 %v224, %v400
    %v402 = vpop.f32.mrf.mxu0
    %403 = vmatprep.mubr.f32.mxu0 0.0
    %v404 = vand.u32 %v73, 4294901760
    %405 = vmatmul.mubr.f32.gmra.mxu0 %v404
    %v406 = vpop.f32.mrf.mxu0
    %v407 = vadd.f32 %v234, %v406
    %v408 = vpop.f32.mrf.mxu0
    %409 = vmatprep.mubr.f32.mxu0 0.0
    %v410 = vand.u32 %v76, 4294901760
    %411 = vmatmul.mubr.f32.gmra.mxu0 %v410
    %v412 = vpop.f32.mrf.mxu0
    %v413 = vadd.f32 %v244, %v412
    %v414 = vpop.f32.mrf.mxu0
    %415 = vdwg.mxu0
    %416 = vmatprep.subr.mxu0 0.0
    %v417 = vand.u32 %v124, 4294901760
    %v418 = vsub.f32 %v124, %v417
    %419 = vmatpush1.xpose.msra.mxu0 %v418
    %420 = vmatprep.subr.mxu0 0.0
    %v421 = vand.u32 %v121, 4294901760
    %v422 = vsub.f32 %v121, %v421
    %423 = vmatpush1.xpose.msra.mxu0 %v422
    %424 = vmatprep.subr.mxu0 0.0
    %v425 = vand.u32 %v118, 4294901760
    %v426 = vsub.f32 %v118, %v425
    %427 = vmatpush1.xpose.msra.mxu0 %v426
    %428 = vmatprep.subr.mxu0 0.0
    %v429 = vand.u32 %v115, 4294901760
    %v430 = vsub.f32 %v115, %v429
    %431 = vmatpush1.xpose.msra.mxu0 %v430
    %432 = vmatprep.subr.mxu0 0.0
    %v433 = vand.u32 %v112, 4294901760
    %v434 = vsub.f32 %v112, %v433
    %435 = vmatpush1.xpose.msra.mxu0 %v434
    %436 = vmatprep.subr.mxu0 0.0
    %v437 = vand.u32 %v109, 4294901760
    %v438 = vsub.f32 %v109, %v437
    %439 = vmatpush1.xpose.msra.mxu0 %v438
    %440 = vmatprep.subr.mxu0 0.0
    %v441 = vand.u32 %v106, 4294901760
    %v442 = vsub.f32 %v106, %v441
    %443 = vmatpush1.xpose.msra.mxu0 %v442
    %444 = vmatprep.subr.mxu0 0.0
    %v445 = vand.u32 %v103, 4294901760
    %v446 = vsub.f32 %v103, %v445
    %447 = vmatpush1.xpose.msra.mxu0 %v446
    %448 = vmatprep.subr.mxu0 0.0
    %v449 = vand.u32 %v100, 4294901760
    %v450 = vsub.f32 %v100, %v449
    %451 = vmatpush1.xpose.msra.mxu0 %v450
    %452 = vmatprep.subr.mxu0 0.0
    %v453 = vand.u32 %v97, 4294901760
    %v454 = vsub.f32 %v97, %v453
    %455 = vmatpush1.xpose.msra.mxu0 %v454
    %456 = vmatprep.subr.mxu0 0.0
    %v457 = vand.u32 %v94, 4294901760
    %v458 = vsub.f32 %v94, %v457
    %459 = vmatpush1.xpose.msra.mxu0 %v458
    %460 = vmatprep.subr.mxu0 0.0
    %v461 = vand.u32 %v91, 4294901760
    %v462 = vsub.f32 %v91, %v461
    %463 = vmatpush1.xpose.msra.mxu0 %v462
    %464 = vmatprep.subr.mxu0 0.0
    %v465 = vand.u32 %v88, 4294901760
    %v466 = vsub.f32 %v88, %v465
    %467 = vmatpush1.xpose.msra.mxu0 %v466
    %468 = vmatprep.subr.mxu0 0.0
    %v469 = vand.u32 %v85, 4294901760
    %v470 = vsub.f32 %v85, %v469
    %471 = vmatpush1.xpose.msra.mxu0 %v470
    %472 = vmatprep.subr.mxu0 0.0
    %v473 = vand.u32 %v82, 4294901760
    %v474 = vsub.f32 %v82, %v473
    %475 = vmatpush1.xpose.msra.mxu0 %v474
    %476 = vmatprep.subr.mxu0 0.0
    %v477 = vand.u32 %v79, 4294901760
    %v478 = vsub.f32 %v79, %v477
    %479 = vmatpush1.xpose.msra.mxu0 %v478
    %480 = vmatprep.subr.mxu0 0.0
    %481 = vmatpush2.xpose.msra.mxu0 0.0
    %482 = vmatprep.subr.mxu0 0.0
    %483 = vmatpush2.xpose.msra.mxu0 0.0
    %484 = vmatprep.subr.mxu0 0.0
    %485 = vmatpush2.xpose.msra.mxu0 0.0
    %486 = vmatprep.subr.mxu0 0.0
    %487 = vmatpush2.xpose.msra.mxu0 0.0
    %488 = vmatprep.subr.mxu0 0.0
    %489 = vmatpush2.xpose.msra.mxu0 0.0
    %490 = vmatprep.subr.mxu0 0.0
    %491 = vmatpush2.xpose.msra.mxu0 0.0
    %492 = vmatprep.subr.mxu0 0.0
    %493 = vmatpush2.xpose.msra.mxu0 0.0
    %494 = vmatprep.subr.mxu0 0.0
    %495 = vmatpush2.xpose.msra.mxu0 0.0
    %496 = vmatprep.subr.mxu0 0.0
    %497 = vmatpush2.xpose.msra.mxu0 0.0
    %498 = vmatprep.subr.mxu0 0.0
    %499 = vmatpush2.xpose.msra.mxu0 0.0
    %500 = vmatprep.subr.mxu0 0.0
    %501 = vmatpush2.xpose.msra.mxu0 0.0
    %502 = vmatprep.subr.mxu0 0.0
    %503 = vmatpush2.xpose.msra.mxu0 0.0
    %504 = vmatprep.subr.mxu0 0.0
    %505 = vmatpush2.xpose.msra.mxu0 0.0
    %506 = vmatprep.subr.mxu0 0.0
    %507 = vmatpush2.xpose.msra.mxu0 0.0
    %508 = vmatprep.subr.mxu0 0.0
    %509 = vmatpush2.xpose.msra.mxu0 0.0
    %510 = vmatprep.subr.mxu0 0.0
    %511 = vmatpush2.xpose.msra.mxu0 0.0
    %512 = vmatprep.mubr.f32.mxu0 0.0
    %v513 = vand.u32 %v67, 4294901760
    %v514 = vsub.f32 %v67, %v513
    %515 = vmatmul.mubr.f32.gmra.mxu0 %v514
    %v516 = vpop.f32.mrf.mxu0
    %v517 = vadd.f32 %v395, %v516
    %v518 = vpop.f32.mrf.mxu0
    %519 = vmatprep.mubr.f32.mxu0 0.0
    %v520 = vand.u32 %v70, 4294901760
    %v521 = vsub.f32 %v70, %v520
    %522 = vmatmul.mubr.f32.gmra.mxu0 %v521
    %v523 = vpop.f32.mrf.mxu0
    %v524 = vadd.f32 %v401, %v523
    %v525 = vpop.f32.mrf.mxu0
    %526 = vmatprep.mubr.f32.mxu0 0.0
    %v527 = vand.u32 %v73, 4294901760
    %v528 = vsub.f32 %v73, %v527
    %529 = vmatmul.mubr.f32.gmra.mxu0 %v528
    %v530 = vpop.f32.mrf.mxu0
    %v531 = vadd.f32 %v407, %v530
    %v532 = vpop.f32.mrf.mxu0
    %533 = vmatprep.mubr.f32.mxu0 0.0
    %v534 = vand.u32 %v76, 4294901760
    %v535 = vsub.f32 %v76, %v534
    %536 = vmatmul.mubr.f32.gmra.mxu0 %v535
    %v537 = vpop.f32.mrf.mxu0
    %v538 = vadd.f32 %v413, %v537
    %v539 = vpop.f32.mrf.mxu0
    %540 = vdwg.mxu0
    %541 = vmatprep.subr.mxu0 0.0
    %v542 = vand.u32 %v124, 4294901760
    %543 = vmatpush1.xpose.msra.mxu0 %v542
    %544 = vmatprep.subr.mxu0 0.0
    %v545 = vand.u32 %v121, 4294901760
    %546 = vmatpush1.xpose.msra.mxu0 %v545
    %547 = vmatprep.subr.mxu0 0.0
    %v548 = vand.u32 %v118, 4294901760
    %549 = vmatpush1.xpose.msra.mxu0 %v548
    %550 = vmatprep.subr.mxu0 0.0
    %v551 = vand.u32 %v115, 4294901760
    %552 = vmatpush1.xpose.msra.mxu0 %v551
    %553 = vmatprep.subr.mxu0 0.0
    %v554 = vand.u32 %v112, 4294901760
    %555 = vmatpush1.xpose.msra.mxu0 %v554
    %556 = vmatprep.subr.mxu0 0.0
    %v557 = vand.u32 %v109, 4294901760
    %558 = vmatpush1.xpose.msra.mxu0 %v557
    %559 = vmatprep.subr.mxu0 0.0
    %v560 = vand.u32 %v106, 4294901760
    %561 = vmatpush1.xpose.msra.mxu0 %v560
    %562 = vmatprep.subr.mxu0 0.0
    %v563 = vand.u32 %v103, 4294901760
    %564 = vmatpush1.xpose.msra.mxu0 %v563
    %565 = vmatprep.subr.mxu0 0.0
    %v566 = vand.u32 %v100, 4294901760
    %567 = vmatpush1.xpose.msra.mxu0 %v566
    %568 = vmatprep.subr.mxu0 0.0
    %v569 = vand.u32 %v97, 4294901760
    %570 = vmatpush1.xpose.msra.mxu0 %v569
    %571 = vmatprep.subr.mxu0 0.0
    %v572 = vand.u32 %v94, 4294901760
    %573 = vmatpush1.xpose.msra.mxu0 %v572
    %574 = vmatprep.subr.mxu0 0.0
    %v575 = vand.u32 %v91, 4294901760
    %576 = vmatpush1.xpose.msra.mxu0 %v575
    %577 = vmatprep.subr.mxu0 0.0
    %v578 = vand.u32 %v88, 4294901760
    %579 = vmatpush1.xpose.msra.mxu0 %v578
    %580 = vmatprep.subr.mxu0 0.0
    %v581 = vand.u32 %v85, 4294901760
    %582 = vmatpush1.xpose.msra.mxu0 %v581
    %583 = vmatprep.subr.mxu0 0.0
    %v584 = vand.u32 %v82, 4294901760
    %585 = vmatpush1.xpose.msra.mxu0 %v584
    %586 = vmatprep.subr.mxu0 0.0
    %v587 = vand.u32 %v79, 4294901760
    %588 = vmatpush1.xpose.msra.mxu0 %v587
    %589 = vmatprep.subr.mxu0 0.0
    %590 = vmatpush2.xpose.msra.mxu0 0.0
    %591 = vmatprep.subr.mxu0 0.0
    %592 = vmatpush2.xpose.msra.mxu0 0.0
    %593 = vmatprep.subr.mxu0 0.0
    %594 = vmatpush2.xpose.msra.mxu0 0.0
    %595 = vmatprep.subr.mxu0 0.0
    %596 = vmatpush2.xpose.msra.mxu0 0.0
    %597 = vmatprep.subr.mxu0 0.0
    %598 = vmatpush2.xpose.msra.mxu0 0.0
    %599 = vmatprep.subr.mxu0 0.0
    %600 = vmatpush2.xpose.msra.mxu0 0.0
    %601 = vmatprep.subr.mxu0 0.0
    %602 = vmatpush2.xpose.msra.mxu0 0.0
    %603 = vmatprep.subr.mxu0 0.0
    %604 = vmatpush2.xpose.msra.mxu0 0.0
    %605 = vmatprep.subr.mxu0 0.0
    %606 = vmatpush2.xpose.msra.mxu0 0.0
    %607 = vmatprep.subr.mxu0 0.0
    %608 = vmatpush2.xpose.msra.mxu0 0.0
    %609 = vmatprep.subr.mxu0 0.0
    %610 = vmatpush2.xpose.msra.mxu0 0.0
    %611 = vmatprep.subr.mxu0 0.0
    %612 = vmatpush2.xpose.msra.mxu0 0.0
    %613 = vmatprep.subr.mxu0 0.0
    %614 = vmatpush2.xpose.msra.mxu0 0.0
    %615 = vmatprep.subr.mxu0 0.0
    %616 = vmatpush2.xpose.msra.mxu0 0.0
    %617 = vmatprep.subr.mxu0 0.0
    %618 = vmatpush2.xpose.msra.mxu0 0.0
    %619 = vmatprep.subr.mxu0 0.0
    %620 = vmatpush2.xpose.msra.mxu0 0.0
    %621 = vmatprep.mubr.f32.mxu0 0.0
    %v622 = vand.u32 %v67, 4294901760
    %v623 = vsub.f32 %v67, %v622
    %v624 = vand.u32 %v623, 4294901760
    %625 = vmatmul.mubr.f32.gmra.mxu0 %v624
    %v626 = vpop.f32.mrf.mxu0
    %v627 = vadd.f32 %v517, %v626
    %v628 = vpop.f32.mrf.mxu0
    %629 = vmatprep.mubr.f32.mxu0 0.0
    %v630 = vand.u32 %v70, 4294901760
    %v631 = vsub.f32 %v70, %v630
    %v632 = vand.u32 %v631, 4294901760
    %633 = vmatmul.mubr.f32.gmra.mxu0 %v632
    %v634 = vpop.f32.mrf.mxu0
    %v635 = vadd.f32 %v524, %v634
    %v636 = vpop.f32.mrf.mxu0
    %637 = vmatprep.mubr.f32.mxu0 0.0
    %v638 = vand.u32 %v73, 4294901760
    %v639 = vsub.f32 %v73, %v638
    %v640 = vand.u32 %v639, 4294901760
    %641 = vmatmul.mubr.f32.gmra.mxu0 %v640
    %v642 = vpop.f32.mrf.mxu0
    %v643 = vadd.f32 %v531, %v642
    %v644 = vpop.f32.mrf.mxu0
    %645 = vmatprep.mubr.f32.mxu0 0.0
    %v646 = vand.u32 %v76, 4294901760
    %v647 = vsub.f32 %v76, %v646
    %v648 = vand.u32 %v647, 4294901760
    %649 = vmatmul.mubr.f32.gmra.mxu0 %v648
    %v650 = vpop.f32.mrf.mxu0
    %v651 = vadd.f32 %v538, %v650
    %v652 = vpop.f32.mrf.mxu0
    %653 = vdwg.mxu0
    %654 = vmatprep.subr.mxu0 0.0
    %v655 = vand.u32 %v124, 4294901760
    %v656 = vsub.f32 %v124, %v655
    %v657 = vand.u32 %v656, 4294901760
    %658 = vmatpush1.xpose.msra.mxu0 %v657
    %659 = vmatprep.subr.mxu0 0.0
    %v660 = vand.u32 %v121, 4294901760
    %v661 = vsub.f32 %v121, %v660
    %v662 = vand.u32 %v661, 4294901760
    %663 = vmatpush1.xpose.msra.mxu0 %v662
    %664 = vmatprep.subr.mxu0 0.0
    %v665 = vand.u32 %v118, 4294901760
    %v666 = vsub.f32 %v118, %v665
    %v667 = vand.u32 %v666, 4294901760
    %668 = vmatpush1.xpose.msra.mxu0 %v667
    %669 = vmatprep.subr.mxu0 0.0
    %v670 = vand.u32 %v115, 4294901760
    %v671 = vsub.f32 %v115, %v670
    %v672 = vand.u32 %v671, 4294901760
    %673 = vmatpush1.xpose.msra.mxu0 %v672
    %674 = vmatprep.subr.mxu0 0.0
    %v675 = vand.u32 %v112, 4294901760
    %v676 = vsub.f32 %v112, %v675
    %v677 = vand.u32 %v676, 4294901760
    %678 = vmatpush1.xpose.msra.mxu0 %v677
    %679 = vmatprep.subr.mxu0 0.0
    %v680 = vand.u32 %v109, 4294901760
    %v681 = vsub.f32 %v109, %v680
    %v682 = vand.u32 %v681, 4294901760
    %683 = vmatpush1.xpose.msra.mxu0 %v682
    %684 = vmatprep.subr.mxu0 0.0
    %v685 = vand.u32 %v106, 4294901760
    %v686 = vsub.f32 %v106, %v685
    %v687 = vand.u32 %v686, 4294901760
    %688 = vmatpush1.xpose.msra.mxu0 %v687
    %689 = vmatprep.subr.mxu0 0.0
    %v690 = vand.u32 %v103, 4294901760
    %v691 = vsub.f32 %v103, %v690
    %v692 = vand.u32 %v691, 4294901760
    %693 = vmatpush1.xpose.msra.mxu0 %v692
    %694 = vmatprep.subr.mxu0 0.0
    %v695 = vand.u32 %v100, 4294901760
    %v696 = vsub.f32 %v100, %v695
    %v697 = vand.u32 %v696, 4294901760
    %698 = vmatpush1.xpose.msra.mxu0 %v697
    %699 = vmatprep.subr.mxu0 0.0
    %v700 = vand.u32 %v97, 4294901760
    %v701 = vsub.f32 %v97, %v700
    %v702 = vand.u32 %v701, 4294901760
    %703 = vmatpush1.xpose.msra.mxu0 %v702
    %704 = vmatprep.subr.mxu0 0.0
    %v705 = vand.u32 %v94, 4294901760
    %v706 = vsub.f32 %v94, %v705
    %v707 = vand.u32 %v706, 4294901760
    %708 = vmatpush1.xpose.msra.mxu0 %v707
    %709 = vmatprep.subr.mxu0 0.0
    %v710 = vand.u32 %v91, 4294901760
    %v711 = vsub.f32 %v91, %v710
    %v712 = vand.u32 %v711, 4294901760
    %713 = vmatpush1.xpose.msra.mxu0 %v712
    %714 = vmatprep.subr.mxu0 0.0
    %v715 = vand.u32 %v88, 4294901760
    %v716 = vsub.f32 %v88, %v715
    %v717 = vand.u32 %v716, 4294901760
    %718 = vmatpush1.xpose.msra.mxu0 %v717
    %719 = vmatprep.subr.mxu0 0.0
    %v720 = vand.u32 %v85, 4294901760
    %v721 = vsub.f32 %v85, %v720
    %v722 = vand.u32 %v721, 4294901760
    %723 = vmatpush1.xpose.msra.mxu0 %v722
    %724 = vmatprep.subr.mxu0 0.0
    %v725 = vand.u32 %v82, 4294901760
    %v726 = vsub.f32 %v82, %v725
    %v727 = vand.u32 %v726, 4294901760
    %728 = vmatpush1.xpose.msra.mxu0 %v727
    %729 = vmatprep.subr.mxu0 0.0
    %v730 = vand.u32 %v79, 4294901760
    %v731 = vsub.f32 %v79, %v730
    %v732 = vand.u32 %v731, 4294901760
    %733 = vmatpush1.xpose.msra.mxu0 %v732
    %734 = vmatprep.subr.mxu0 0.0
    %735 = vmatpush2.xpose.msra.mxu0 0.0
    %736 = vmatprep.subr.mxu0 0.0
    %737 = vmatpush2.xpose.msra.mxu0 0.0
    %738 = vmatprep.subr.mxu0 0.0
    %739 = vmatpush2.xpose.msra.mxu0 0.0
    %740 = vmatprep.subr.mxu0 0.0
    %741 = vmatpush2.xpose.msra.mxu0 0.0
    %742 = vmatprep.subr.mxu0 0.0
    %743 = vmatpush2.xpose.msra.mxu0 0.0
    %744 = vmatprep.subr.mxu0 0.0
    %745 = vmatpush2.xpose.msra.mxu0 0.0
    %746 = vmatprep.subr.mxu0 0.0
    %747 = vmatpush2.xpose.msra.mxu0 0.0
    %748 = vmatprep.subr.mxu0 0.0
    %749 = vmatpush2.xpose.msra.mxu0 0.0
    %750 = vmatprep.subr.mxu0 0.0
    %751 = vmatpush2.xpose.msra.mxu0 0.0
    %752 = vmatprep.subr.mxu0 0.0
    %753 = vmatpush2.xpose.msra.mxu0 0.0
    %754 = vmatprep.subr.mxu0 0.0
    %755 = vmatpush2.xpose.msra.mxu0 0.0
    %756 = vmatprep.subr.mxu0 0.0
    %757 = vmatpush2.xpose.msra.mxu0 0.0
    %758 = vmatprep.subr.mxu0 0.0
    %759 = vmatpush2.xpose.msra.mxu0 0.0
    %760 = vmatprep.subr.mxu0 0.0
    %761 = vmatpush2.xpose.msra.mxu0 0.0
    %762 = vmatprep.subr.mxu0 0.0
    %763 = vmatpush2.xpose.msra.mxu0 0.0
    %764 = vmatprep.subr.mxu0 0.0
    %765 = vmatpush2.xpose.msra.mxu0 0.0
    %766 = vmatprep.mubr.f32.mxu0 0.0
    %v767 = vand.u32 %v67, 4294901760
    %768 = vmatmul.mubr.f32.gmra.mxu0 %v767
    %v769 = vpop.f32.mrf.mxu0
    %v770 = vadd.f32 %v627, %v769
    %v771 = vpop.f32.mrf.mxu0
    %772 = vmatprep.mubr.f32.mxu0 0.0
    %v773 = vand.u32 %v70, 4294901760
    %774 = vmatmul.mubr.f32.gmra.mxu0 %v773
    %v775 = vpop.f32.mrf.mxu0
    %v776 = vadd.f32 %v635, %v775
    %v777 = vpop.f32.mrf.mxu0
    %778 = vmatprep.mubr.f32.mxu0 0.0
    %v779 = vand.u32 %v73, 4294901760
    %780 = vmatmul.mubr.f32.gmra.mxu0 %v779
    %v781 = vpop.f32.mrf.mxu0
    %v782 = vadd.f32 %v643, %v781
    %v783 = vpop.f32.mrf.mxu0
    %784 = vmatprep.mubr.f32.mxu0 0.0
    %v785 = vand.u32 %v76, 4294901760
    %786 = vmatmul.mubr.f32.gmra.mxu0 %v785
    %v787 = vpop.f32.mrf.mxu0
    %v788 = vadd.f32 %v651, %v787
    %v789 = vpop.f32.mrf.mxu0
    %790 = vdwg.mxu0
    %791 = vmatprep.subr.mxu0 0.0
    %v792 = vand.u32 %v124, 4294901760
    %793 = vmatpush1.xpose.msra.mxu0 %v792
    %794 = vmatprep.subr.mxu0 0.0
    %v795 = vand.u32 %v121, 4294901760
    %796 = vmatpush1.xpose.msra.mxu0 %v795
    %797 = vmatprep.subr.mxu0 0.0
    %v798 = vand.u32 %v118, 4294901760
    %799 = vmatpush1.xpose.msra.mxu0 %v798
    %800 = vmatprep.subr.mxu0 0.0
    %v801 = vand.u32 %v115, 4294901760
    %802 = vmatpush1.xpose.msra.mxu0 %v801
    %803 = vmatprep.subr.mxu0 0.0
    %v804 = vand.u32 %v112, 4294901760
    %805 = vmatpush1.xpose.msra.mxu0 %v804
    %806 = vmatprep.subr.mxu0 0.0
    %v807 = vand.u32 %v109, 4294901760
    %808 = vmatpush1.xpose.msra.mxu0 %v807
    %809 = vmatprep.subr.mxu0 0.0
    %v810 = vand.u32 %v106, 4294901760
    %811 = vmatpush1.xpose.msra.mxu0 %v810
    %812 = vmatprep.subr.mxu0 0.0
    %v813 = vand.u32 %v103, 4294901760
    %814 = vmatpush1.xpose.msra.mxu0 %v813
    %815 = vmatprep.subr.mxu0 0.0
    %v816 = vand.u32 %v100, 4294901760
    %817 = vmatpush1.xpose.msra.mxu0 %v816
    %818 = vmatprep.subr.mxu0 0.0
    %v819 = vand.u32 %v97, 4294901760
    %820 = vmatpush1.xpose.msra.mxu0 %v819
    %821 = vmatprep.subr.mxu0 0.0
    %v822 = vand.u32 %v94, 4294901760
    %823 = vmatpush1.xpose.msra.mxu0 %v822
    %824 = vmatprep.subr.mxu0 0.0
    %v825 = vand.u32 %v91, 4294901760
    %826 = vmatpush1.xpose.msra.mxu0 %v825
    %827 = vmatprep.subr.mxu0 0.0
    %v828 = vand.u32 %v88, 4294901760
    %829 = vmatpush1.xpose.msra.mxu0 %v828
    %830 = vmatprep.subr.mxu0 0.0
    %v831 = vand.u32 %v85, 4294901760
    %832 = vmatpush1.xpose.msra.mxu0 %v831
    %833 = vmatprep.subr.mxu0 0.0
    %v834 = vand.u32 %v82, 4294901760
    %835 = vmatpush1.xpose.msra.mxu0 %v834
    %836 = vmatprep.subr.mxu0 0.0
    %v837 = vand.u32 %v79, 4294901760
    %838 = vmatpush1.xpose.msra.mxu0 %v837
    %839 = vmatprep.subr.mxu0 0.0
    %840 = vmatpush2.xpose.msra.mxu0 0.0
    %841 = vmatprep.subr.mxu0 0.0
    %842 = vmatpush2.xpose.msra.mxu0 0.0
    %843 = vmatprep.subr.mxu0 0.0
    %844 = vmatpush2.xpose.msra.mxu0 0.0
    %845 = vmatprep.subr.mxu0 0.0
    %846 = vmatpush2.xpose.msra.mxu0 0.0
    %847 = vmatprep.subr.mxu0 0.0
    %848 = vmatpush2.xpose.msra.mxu0 0.0
    %849 = vmatprep.subr.mxu0 0.0
    %850 = vmatpush2.xpose.msra.mxu0 0.0
    %851 = vmatprep.subr.mxu0 0.0
    %852 = vmatpush2.xpose.msra.mxu0 0.0
    %853 = vmatprep.subr.mxu0 0.0
    %854 = vmatpush2.xpose.msra.mxu0 0.0
    %855 = vmatprep.subr.mxu0 0.0
    %856 = vmatpush2.xpose.msra.mxu0 0.0
    %857 = vmatprep.subr.mxu0 0.0
    %858 = vmatpush2.xpose.msra.mxu0 0.0
    %859 = vmatprep.subr.mxu0 0.0
    %860 = vmatpush2.xpose.msra.mxu0 0.0
    %861 = vmatprep.subr.mxu0 0.0
    %862 = vmatpush2.xpose.msra.mxu0 0.0
    %863 = vmatprep.subr.mxu0 0.0
    %864 = vmatpush2.xpose.msra.mxu0 0.0
    %865 = vmatprep.subr.mxu0 0.0
    %866 = vmatpush2.xpose.msra.mxu0 0.0
    %867 = vmatprep.subr.mxu0 0.0
    %868 = vmatpush2.xpose.msra.mxu0 0.0
    %869 = vmatprep.subr.mxu0 0.0
    %870 = vmatpush2.xpose.msra.mxu0 0.0
    %871 = vmatprep.mubr.f32.mxu0 0.0
    %v872 = vand.u32 %v67, 4294901760
    %873 = vmatmul.mubr.f32.gmra.mxu0 %v872
    %v874 = vpop.f32.mrf.mxu0
    %v875 = vadd.f32 %v770, %v874
    %v876 = vpop.f32.mrf.mxu0
    %877 = vmatprep.mubr.f32.mxu0 0.0
    %v878 = vand.u32 %v70, 4294901760
    %879 = vmatmul.mubr.f32.gmra.mxu0 %v878
    %v880 = vpop.f32.mrf.mxu0
    %v881 = vadd.f32 %v776, %v880
    %v882 = vpop.f32.mrf.mxu0
    %883 = vmatprep.mubr.f32.mxu0 0.0
    %v884 = vand.u32 %v73, 4294901760
    %885 = vmatmul.mubr.f32.gmra.mxu0 %v884
    %v886 = vpop.f32.mrf.mxu0
    %v887 = vadd.f32 %v782, %v886
    %v888 = vpop.f32.mrf.mxu0
    %889 = vmatprep.mubr.f32.mxu0 0.0
    %v890 = vand.u32 %v76, 4294901760
    %891 = vmatmul.mubr.f32.gmra.mxu0 %v890
    %v892 = vpop.f32.mrf.mxu0
    %v893 = vadd.f32 %v788, %v892
    %v894 = vpop.f32.mrf.mxu0
    %895 = vdwg.mxu0
    %v896 = vmax.f32 %v875, 0.0
    %v897 = vmax.f32 %v881, 0.0
    %v898 = vmax.f32 %v887, 0.0
    %v899 = vmax.f32 %v893, 0.0
    %v900 = vld [vmem:[%s3] sm:$0x3]
    %v901 = vld [vmem:[%s4] sm:$0x3]
    %903 = vset.pattern.permute.xlu0 0
    %904 = vperm.xlu0 %903, %v901
    %v905 = vpop.permute.xlu0 %904
    %vm907 = vcmask 261120
    %v909 = vsel %vm907, %v900, 0
    %911 = vmatprep.subr.mxu0 0.0
    %912 = vmatpush1.msra.mxu0 0.0
    %913 = vmatprep.subr.mxu0 0.0
    %914 = vmatpush1.msra.mxu0 0.0
    %915 = vmatprep.subr.mxu0 0.0
    %916 = vmatpush1.msra.mxu0 0.0
    %917 = vmatprep.subr.mxu0 0.0
    %918 = vmatpush1.msra.mxu0 0.0
    %919 = vmatprep.subr.mxu0 0.0
    %920 = vmatpush1.msra.mxu0 0.0
    %921 = vmatprep.subr.mxu0 0.0
    %922 = vmatpush1.msra.mxu0 0.0
    %923 = vmatprep.subr.mxu0 0.0
    %924 = vmatpush1.msra.mxu0 0.0
    %925 = vmatprep.subr.mxu0 0.0
    %926 = vmatpush1.msra.mxu0 0.0
    %927 = vmatprep.subr.mxu0 0.0
    %928 = vmatpush1.msra.mxu0 0.0
    %929 = vmatprep.subr.mxu0 0.0
    %930 = vmatpush1.msra.mxu0 0.0
    %931 = vmatprep.subr.mxu0 0.0
    %932 = vmatpush1.msra.mxu0 0.0
    %933 = vmatprep.subr.mxu0 0.0
    %934 = vmatpush1.msra.mxu0 0.0
    %935 = vmatprep.subr.mxu0 0.0
    %v936 = vand.u32 %v899, 4294901760
    %937 = vmatpush1.msra.mxu0 %v936
    %938 = vmatprep.subr.mxu0 0.0
    %v939 = vand.u32 %v898, 4294901760
    %940 = vmatpush1.msra.mxu0 %v939
    %941 = vmatprep.subr.mxu0 0.0
    %v942 = vand.u32 %v897, 4294901760
    %943 = vmatpush1.msra.mxu0 %v942
    %944 = vmatprep.subr.mxu0 0.0
    %v945 = vand.u32 %v896, 4294901760
    %946 = vmatpush1.msra.mxu0 %v945
    %947 = vmatprep.subr.mxu0 0.0
    %948 = vmatpush2.msra.mxu0 0.0
    %949 = vmatprep.subr.mxu0 0.0
    %950 = vmatpush2.msra.mxu0 0.0
    %951 = vmatprep.subr.mxu0 0.0
    %952 = vmatpush2.msra.mxu0 0.0
    %953 = vmatprep.subr.mxu0 0.0
    %954 = vmatpush2.msra.mxu0 0.0
    %955 = vmatprep.subr.mxu0 0.0
    %956 = vmatpush2.msra.mxu0 0.0
    %957 = vmatprep.subr.mxu0 0.0
    %958 = vmatpush2.msra.mxu0 0.0
    %959 = vmatprep.subr.mxu0 0.0
    %960 = vmatpush2.msra.mxu0 0.0
    %961 = vmatprep.subr.mxu0 0.0
    %962 = vmatpush2.msra.mxu0 0.0
    %963 = vmatprep.subr.mxu0 0.0
    %964 = vmatpush2.msra.mxu0 0.0
    %965 = vmatprep.subr.mxu0 0.0
    %966 = vmatpush2.msra.mxu0 0.0
    %967 = vmatprep.subr.mxu0 0.0
    %968 = vmatpush2.msra.mxu0 0.0
    %969 = vmatprep.subr.mxu0 0.0
    %970 = vmatpush2.msra.mxu0 0.0
    %971 = vmatprep.subr.mxu0 0.0
    %972 = vmatpush2.msra.mxu0 0.0
    %973 = vmatprep.subr.mxu0 0.0
    %974 = vmatpush2.msra.mxu0 0.0
    %975 = vmatprep.subr.mxu0 0.0
    %976 = vmatpush2.msra.mxu0 0.0
    %977 = vmatprep.subr.mxu0 0.0
    %978 = vmatpush2.msra.mxu0 0.0
    %979 = vmatprep.mubr.f32.mxu0 0.0
    %v980 = vand.u32 %v909, 4294901760
    %v981 = vsub.f32 %v909, %v980
    %v982 = vand.u32 %v981, 4294901760
    %v983 = vsub.f32 %v981, %v982
    %v984 = vand.u32 %v983, 4294901760
    %985 = vmatmul.mubr.f32.gmra.mxu0 %v984
    %v986 = vpop.f32.mrf.mxu0
    %v987 = vadd.f32 %v905, %v986
    %v988 = vpop.f32.mrf.mxu0
    %989 = vdwg.mxu0
    %990 = vmatprep.subr.mxu0 0.0
    %991 = vmatpush1.msra.mxu0 0.0
    %992 = vmatprep.subr.mxu0 0.0
    %993 = vmatpush1.msra.mxu0 0.0
    %994 = vmatprep.subr.mxu0 0.0
    %995 = vmatpush1.msra.mxu0 0.0
    %996 = vmatprep.subr.mxu0 0.0
    %997 = vmatpush1.msra.mxu0 0.0
    %998 = vmatprep.subr.mxu0 0.0
    %999 = vmatpush1.msra.mxu0 0.0
    %1000 = vmatprep.subr.mxu0 0.0
    %1001 = vmatpush1.msra.mxu0 0.0
    %1002 = vmatprep.subr.mxu0 0.0
    %1003 = vmatpush1.msra.mxu0 0.0
    %1004 = vmatprep.subr.mxu0 0.0
    %1005 = vmatpush1.msra.mxu0 0.0
    %1006 = vmatprep.subr.mxu0 0.0
    %1007 = vmatpush1.msra.mxu0 0.0
    %1008 = vmatprep.subr.mxu0 0.0
    %1009 = vmatpush1.msra.mxu0 0.0
    %1010 = vmatprep.subr.mxu0 0.0
    %1011 = vmatpush1.msra.mxu0 0.0
    %1012 = vmatprep.subr.mxu0 0.0
    %1013 = vmatpush1.msra.mxu0 0.0
    %1014 = vmatprep.subr.mxu0 0.0
    %v1015 = vand.u32 %v899, 4294901760
    %v1016 = vsub.f32 %v899, %v1015
    %v1017 = vand.u32 %v1016, 4294901760
    %v1018 = vsub.f32 %v1016, %v1017
    %v1019 = vand.u32 %v1018, 4294901760
    %1020 = vmatpush1.msra.mxu0 %v1019
    %1021 = vmatprep.subr.mxu0 0.0
    %v1022 = vand.u32 %v898, 4294901760
    %v1023 = vsub.f32 %v898, %v1022
    %v1024 = vand.u32 %v1023, 4294901760
    %v1025 = vsub.f32 %v1023, %v1024
    %v1026 = vand.u32 %v1025, 4294901760
    %1027 = vmatpush1.msra.mxu0 %v1026
    %1028 = vmatprep.subr.mxu0 0.0
    %v1029 = vand.u32 %v897, 4294901760
    %v1030 = vsub.f32 %v897, %v1029
    %v1031 = vand.u32 %v1030, 4294901760
    %v1032 = vsub.f32 %v1030, %v1031
    %v1033 = vand.u32 %v1032, 4294901760
    %1034 = vmatpush1.msra.mxu0 %v1033
    %1035 = vmatprep.subr.mxu0 0.0
    %v1036 = vand.u32 %v896, 4294901760
    %v1037 = vsub.f32 %v896, %v1036
    %v1038 = vand.u32 %v1037, 4294901760
    %v1039 = vsub.f32 %v1037, %v1038
    %v1040 = vand.u32 %v1039, 4294901760
    %1041 = vmatpush1.msra.mxu0 %v1040
    %1042 = vmatprep.subr.mxu0 0.0
    %1043 = vmatpush2.msra.mxu0 0.0
    %1044 = vmatprep.subr.mxu0 0.0
    %1045 = vmatpush2.msra.mxu0 0.0
    %1046 = vmatprep.subr.mxu0 0.0
    %1047 = vmatpush2.msra.mxu0 0.0
    %1048 = vmatprep.subr.mxu0 0.0
    %1049 = vmatpush2.msra.mxu0 0.0
    %1050 = vmatprep.subr.mxu0 0.0
    %1051 = vmatpush2.msra.mxu0 0.0
    %1052 = vmatprep.subr.mxu0 0.0
    %1053 = vmatpush2.msra.mxu0 0.0
    %1054 = vmatprep.subr.mxu0 0.0
    %1055 = vmatpush2.msra.mxu0 0.0
    %1056 = vmatprep.subr.mxu0 0.0
    %1057 = vmatpush2.msra.mxu0 0.0
    %1058 = vmatprep.subr.mxu0 0.0
    %1059 = vmatpush2.msra.mxu0 0.0
    %1060 = vmatprep.subr.mxu0 0.0
    %1061 = vmatpush2.msra.mxu0 0.0
    %1062 = vmatprep.subr.mxu0 0.0
    %1063 = vmatpush2.msra.mxu0 0.0
    %1064 = vmatprep.subr.mxu0 0.0
    %1065 = vmatpush2.msra.mxu0 0.0
    %1066 = vmatprep.subr.mxu0 0.0
    %1067 = vmatpush2.msra.mxu0 0.0
    %1068 = vmatprep.subr.mxu0 0.0
    %1069 = vmatpush2.msra.mxu0 0.0
    %1070 = vmatprep.subr.mxu0 0.0
    %1071 = vmatpush2.msra.mxu0 0.0
    %1072 = vmatprep.subr.mxu0 0.0
    %1073 = vmatpush2.msra.mxu0 0.0
    %1074 = vmatprep.mubr.f32.mxu0 0.0
    %v1075 = vand.u32 %v909, 4294901760
    %1076 = vmatmul.mubr.f32.gmra.mxu0 %v1075
    %v1077 = vpop.f32.mrf.mxu0
    %v1078 = vadd.f32 %v987, %v1077
    %v1079 = vpop.f32.mrf.mxu0
    %1080 = vdwg.mxu0
    %1081 = vmatprep.subr.mxu0 0.0
    %1082 = vmatpush1.msra.mxu0 0.0
    %1083 = vmatprep.subr.mxu0 0.0
    %1084 = vmatpush1.msra.mxu0 0.0
    %1085 = vmatprep.subr.mxu0 0.0
    %1086 = vmatpush1.msra.mxu0 0.0
    %1087 = vmatprep.subr.mxu0 0.0
    %1088 = vmatpush1.msra.mxu0 0.0
    %1089 = vmatprep.subr.mxu0 0.0
    %1090 = vmatpush1.msra.mxu0 0.0
    %1091 = vmatprep.subr.mxu0 0.0
    %1092 = vmatpush1.msra.mxu0 0.0
    %1093 = vmatprep.subr.mxu0 0.0
    %1094 = vmatpush1.msra.mxu0 0.0
    %1095 = vmatprep.subr.mxu0 0.0
    %1096 = vmatpush1.msra.mxu0 0.0
    %1097 = vmatprep.subr.mxu0 0.0
    %1098 = vmatpush1.msra.mxu0 0.0
    %1099 = vmatprep.subr.mxu0 0.0
    %1100 = vmatpush1.msra.mxu0 0.0
    %1101 = vmatprep.subr.mxu0 0.0
    %1102 = vmatpush1.msra.mxu0 0.0
    %1103 = vmatprep.subr.mxu0 0.0
    %1104 = vmatpush1.msra.mxu0 0.0
    %1105 = vmatprep.subr.mxu0 0.0
    %v1106 = vand.u32 %v899, 4294901760
    %v1107 = vsub.f32 %v899, %v1106
    %1108 = vmatpush1.msra.mxu0 %v1107
    %1109 = vmatprep.subr.mxu0 0.0
    %v1110 = vand.u32 %v898, 4294901760
    %v1111 = vsub.f32 %v898, %v1110
    %1112 = vmatpush1.msra.mxu0 %v1111
    %1113 = vmatprep.subr.mxu0 0.0
    %v1114 = vand.u32 %v897, 4294901760
    %v1115 = vsub.f32 %v897, %v1114
    %1116 = vmatpush1.msra.mxu0 %v1115
    %1117 = vmatprep.subr.mxu0 0.0
    %v1118 = vand.u32 %v896, 4294901760
    %v1119 = vsub.f32 %v896, %v1118
    %1120 = vmatpush1.msra.mxu0 %v1119
    %1121 = vmatprep.subr.mxu0 0.0
    %1122 = vmatpush2.msra.mxu0 0.0
    %1123 = vmatprep.subr.mxu0 0.0
    %1124 = vmatpush2.msra.mxu0 0.0
    %1125 = vmatprep.subr.mxu0 0.0
    %1126 = vmatpush2.msra.mxu0 0.0
    %1127 = vmatprep.subr.mxu0 0.0
    %1128 = vmatpush2.msra.mxu0 0.0
    %1129 = vmatprep.subr.mxu0 0.0
    %1130 = vmatpush2.msra.mxu0 0.0
    %1131 = vmatprep.subr.mxu0 0.0
    %1132 = vmatpush2.msra.mxu0 0.0
    %1133 = vmatprep.subr.mxu0 0.0
    %1134 = vmatpush2.msra.mxu0 0.0
    %1135 = vmatprep.subr.mxu0 0.0
    %1136 = vmatpush2.msra.mxu0 0.0
    %1137 = vmatprep.subr.mxu0 0.0
    %1138 = vmatpush2.msra.mxu0 0.0
    %1139 = vmatprep.subr.mxu0 0.0
    %1140 = vmatpush2.msra.mxu0 0.0
    %1141 = vmatprep.subr.mxu0 0.0
    %1142 = vmatpush2.msra.mxu0 0.0
    %1143 = vmatprep.subr.mxu0 0.0
    %1144 = vmatpush2.msra.mxu0 0.0
    %1145 = vmatprep.subr.mxu0 0.0
    %1146 = vmatpush2.msra.mxu0 0.0
    %1147 = vmatprep.subr.mxu0 0.0
    %1148 = vmatpush2.msra.mxu0 0.0
    %1149 = vmatprep.subr.mxu0 0.0
    %1150 = vmatpush2.msra.mxu0 0.0
    %1151 = vmatprep.subr.mxu0 0.0
    %1152 = vmatpush2.msra.mxu0 0.0
    %1153 = vmatprep.mubr.f32.mxu0 0.0
    %v1154 = vand.u32 %v909, 4294901760
    %v1155 = vsub.f32 %v909, %v1154
    %1156 = vmatmul.mubr.f32.gmra.mxu0 %v1155
    %v1157 = vpop.f32.mrf.mxu0
    %v1158 = vadd.f32 %v1078, %v1157
    %v1159 = vpop.f32.mrf.mxu0
    %1160 = vdwg.mxu0
    %1161 = vmatprep.subr.mxu0 0.0
    %1162 = vmatpush1.msra.mxu0 0.0
    %1163 = vmatprep.subr.mxu0 0.0
    %1164 = vmatpush1.msra.mxu0 0.0
    %1165 = vmatprep.subr.mxu0 0.0
    %1166 = vmatpush1.msra.mxu0 0.0
    %1167 = vmatprep.subr.mxu0 0.0
    %1168 = vmatpush1.msra.mxu0 0.0
    %1169 = vmatprep.subr.mxu0 0.0
    %1170 = vmatpush1.msra.mxu0 0.0
    %1171 = vmatprep.subr.mxu0 0.0
    %1172 = vmatpush1.msra.mxu0 0.0
    %1173 = vmatprep.subr.mxu0 0.0
    %1174 = vmatpush1.msra.mxu0 0.0
    %1175 = vmatprep.subr.mxu0 0.0
    %1176 = vmatpush1.msra.mxu0 0.0
    %1177 = vmatprep.subr.mxu0 0.0
    %1178 = vmatpush1.msra.mxu0 0.0
    %1179 = vmatprep.subr.mxu0 0.0
    %1180 = vmatpush1.msra.mxu0 0.0
    %1181 = vmatprep.subr.mxu0 0.0
    %1182 = vmatpush1.msra.mxu0 0.0
    %1183 = vmatprep.subr.mxu0 0.0
    %1184 = vmatpush1.msra.mxu0 0.0
    %1185 = vmatprep.subr.mxu0 0.0
    %v1186 = vand.u32 %v899, 4294901760
    %1187 = vmatpush1.msra.mxu0 %v1186
    %1188 = vmatprep.subr.mxu0 0.0
    %v1189 = vand.u32 %v898, 4294901760
    %1190 = vmatpush1.msra.mxu0 %v1189
    %1191 = vmatprep.subr.mxu0 0.0
    %v1192 = vand.u32 %v897, 4294901760
    %1193 = vmatpush1.msra.mxu0 %v1192
    %1194 = vmatprep.subr.mxu0 0.0
    %v1195 = vand.u32 %v896, 4294901760
    %1196 = vmatpush1.msra.mxu0 %v1195
    %1197 = vmatprep.subr.mxu0 0.0
    %1198 = vmatpush2.msra.mxu0 0.0
    %1199 = vmatprep.subr.mxu0 0.0
    %1200 = vmatpush2.msra.mxu0 0.0
    %1201 = vmatprep.subr.mxu0 0.0
    %1202 = vmatpush2.msra.mxu0 0.0
    %1203 = vmatprep.subr.mxu0 0.0
    %1204 = vmatpush2.msra.mxu0 0.0
    %1205 = vmatprep.subr.mxu0 0.0
    %1206 = vmatpush2.msra.mxu0 0.0
    %1207 = vmatprep.subr.mxu0 0.0
    %1208 = vmatpush2.msra.mxu0 0.0
    %1209 = vmatprep.subr.mxu0 0.0
    %1210 = vmatpush2.msra.mxu0 0.0
    %1211 = vmatprep.subr.mxu0 0.0
    %1212 = vmatpush2.msra.mxu0 0.0
    %1213 = vmatprep.subr.mxu0 0.0
    %1214 = vmatpush2.msra.mxu0 0.0
    %1215 = vmatprep.subr.mxu0 0.0
    %1216 = vmatpush2.msra.mxu0 0.0
    %1217 = vmatprep.subr.mxu0 0.0
    %1218 = vmatpush2.msra.mxu0 0.0
    %1219 = vmatprep.subr.mxu0 0.0
    %1220 = vmatpush2.msra.mxu0 0.0
    %1221 = vmatprep.subr.mxu0 0.0
    %1222 = vmatpush2.msra.mxu0 0.0
    %1223 = vmatprep.subr.mxu0 0.0
    %1224 = vmatpush2.msra.mxu0 0.0
    %1225 = vmatprep.subr.mxu0 0.0
    %1226 = vmatpush2.msra.mxu0 0.0
    %1227 = vmatprep.subr.mxu0 0.0
    %1228 = vmatpush2.msra.mxu0 0.0
    %1229 = vmatprep.mubr.f32.mxu0 0.0
    %v1230 = vand.u32 %v909, 4294901760
    %v1231 = vsub.f32 %v909, %v1230
    %v1232 = vand.u32 %v1231, 4294901760
    %1233 = vmatmul.mubr.f32.gmra.mxu0 %v1232
    %v1234 = vpop.f32.mrf.mxu0
    %v1235 = vadd.f32 %v1158, %v1234
    %v1236 = vpop.f32.mrf.mxu0
    %1237 = vdwg.mxu0
    %1238 = vmatprep.subr.mxu0 0.0
    %1239 = vmatpush1.msra.mxu0 0.0
    %1240 = vmatprep.subr.mxu0 0.0
    %1241 = vmatpush1.msra.mxu0 0.0
    %1242 = vmatprep.subr.mxu0 0.0
    %1243 = vmatpush1.msra.mxu0 0.0
    %1244 = vmatprep.subr.mxu0 0.0
    %1245 = vmatpush1.msra.mxu0 0.0
    %1246 = vmatprep.subr.mxu0 0.0
    %1247 = vmatpush1.msra.mxu0 0.0
    %1248 = vmatprep.subr.mxu0 0.0
    %1249 = vmatpush1.msra.mxu0 0.0
    %1250 = vmatprep.subr.mxu0 0.0
    %1251 = vmatpush1.msra.mxu0 0.0
    %1252 = vmatprep.subr.mxu0 0.0
    %1253 = vmatpush1.msra.mxu0 0.0
    %1254 = vmatprep.subr.mxu0 0.0
    %1255 = vmatpush1.msra.mxu0 0.0
    %1256 = vmatprep.subr.mxu0 0.0
    %1257 = vmatpush1.msra.mxu0 0.0
    %1258 = vmatprep.subr.mxu0 0.0
    %1259 = vmatpush1.msra.mxu0 0.0
    %1260 = vmatprep.subr.mxu0 0.0
    %1261 = vmatpush1.msra.mxu0 0.0
    %1262 = vmatprep.subr.mxu0 0.0
    %v1263 = vand.u32 %v899, 4294901760
    %v1264 = vsub.f32 %v899, %v1263
    %v1265 = vand.u32 %v1264, 4294901760
    %1266 = vmatpush1.msra.mxu0 %v1265
    %1267 = vmatprep.subr.mxu0 0.0
    %v1268 = vand.u32 %v898, 4294901760
    %v1269 = vsub.f32 %v898, %v1268
    %v1270 = vand.u32 %v1269, 4294901760
    %1271 = vmatpush1.msra.mxu0 %v1270
    %1272 = vmatprep.subr.mxu0 0.0
    %v1273 = vand.u32 %v897, 4294901760
    %v1274 = vsub.f32 %v897, %v1273
    %v1275 = vand.u32 %v1274, 4294901760
    %1276 = vmatpush1.msra.mxu0 %v1275
    %1277 = vmatprep.subr.mxu0 0.0
    %v1278 = vand.u32 %v896, 4294901760
    %v1279 = vsub.f32 %v896, %v1278
    %v1280 = vand.u32 %v1279, 4294901760
    %1281 = vmatpush1.msra.mxu0 %v1280
    %1282 = vmatprep.subr.mxu0 0.0
    %1283 = vmatpush2.msra.mxu0 0.0
    %1284 = vmatprep.subr.mxu0 0.0
    %1285 = vmatpush2.msra.mxu0 0.0
    %1286 = vmatprep.subr.mxu0 0.0
    %1287 = vmatpush2.msra.mxu0 0.0
    %1288 = vmatprep.subr.mxu0 0.0
    %1289 = vmatpush2.msra.mxu0 0.0
    %1290 = vmatprep.subr.mxu0 0.0
    %1291 = vmatpush2.msra.mxu0 0.0
    %1292 = vmatprep.subr.mxu0 0.0
    %1293 = vmatpush2.msra.mxu0 0.0
    %1294 = vmatprep.subr.mxu0 0.0
    %1295 = vmatpush2.msra.mxu0 0.0
    %1296 = vmatprep.subr.mxu0 0.0
    %1297 = vmatpush2.msra.mxu0 0.0
    %1298 = vmatprep.subr.mxu0 0.0
    %1299 = vmatpush2.msra.mxu0 0.0
    %1300 = vmatprep.subr.mxu0 0.0
    %1301 = vmatpush2.msra.mxu0 0.0
    %1302 = vmatprep.subr.mxu0 0.0
    %1303 = vmatpush2.msra.mxu0 0.0
    %1304 = vmatprep.subr.mxu0 0.0
    %1305 = vmatpush2.msra.mxu0 0.0
    %1306 = vmatprep.subr.mxu0 0.0
    %1307 = vmatpush2.msra.mxu0 0.0
    %1308 = vmatprep.subr.mxu0 0.0
    %1309 = vmatpush2.msra.mxu0 0.0
    %1310 = vmatprep.subr.mxu0 0.0
    %1311 = vmatpush2.msra.mxu0 0.0
    %1312 = vmatprep.subr.mxu0 0.0
    %1313 = vmatpush2.msra.mxu0 0.0
    %1314 = vmatprep.mubr.f32.mxu0 0.0
    %v1315 = vand.u32 %v909, 4294901760
    %1316 = vmatmul.mubr.f32.gmra.mxu0 %v1315
    %v1317 = vpop.f32.mrf.mxu0
    %v1318 = vadd.f32 %v1235, %v1317
    %v1319 = vpop.f32.mrf.mxu0
    %1320 = vdwg.mxu0
    %1321 = vmatprep.subr.mxu0 0.0
    %1322 = vmatpush1.msra.mxu0 0.0
    %1323 = vmatprep.subr.mxu0 0.0
    %1324 = vmatpush1.msra.mxu0 0.0
    %1325 = vmatprep.subr.mxu0 0.0
    %1326 = vmatpush1.msra.mxu0 0.0
    %1327 = vmatprep.subr.mxu0 0.0
    %1328 = vmatpush1.msra.mxu0 0.0
    %1329 = vmatprep.subr.mxu0 0.0
    %1330 = vmatpush1.msra.mxu0 0.0
    %1331 = vmatprep.subr.mxu0 0.0
    %1332 = vmatpush1.msra.mxu0 0.0
    %1333 = vmatprep.subr.mxu0 0.0
    %1334 = vmatpush1.msra.mxu0 0.0
    %1335 = vmatprep.subr.mxu0 0.0
    %1336 = vmatpush1.msra.mxu0 0.0
    %1337 = vmatprep.subr.mxu0 0.0
    %1338 = vmatpush1.msra.mxu0 0.0
    %1339 = vmatprep.subr.mxu0 0.0
    %1340 = vmatpush1.msra.mxu0 0.0
    %1341 = vmatprep.subr.mxu0 0.0
    %1342 = vmatpush1.msra.mxu0 0.0
    %1343 = vmatprep.subr.mxu0 0.0
    %1344 = vmatpush1.msra.mxu0 0.0
    %1345 = vmatprep.subr.mxu0 0.0
    %v1346 = vand.u32 %v899, 4294901760
    %1347 = vmatpush1.msra.mxu0 %v1346
    %1348 = vmatprep.subr.mxu0 0.0
    %v1349 = vand.u32 %v898, 4294901760
    %1350 = vmatpush1.msra.mxu0 %v1349
    %1351 = vmatprep.subr.mxu0 0.0
    %v1352 = vand.u32 %v897, 4294901760
    %1353 = vmatpush1.msra.mxu0 %v1352
    %1354 = vmatprep.subr.mxu0 0.0
    %v1355 = vand.u32 %v896, 4294901760
    %1356 = vmatpush1.msra.mxu0 %v1355
    %1357 = vmatprep.subr.mxu0 0.0
    %1358 = vmatpush2.msra.mxu0 0.0
    %1359 = vmatprep.subr.mxu0 0.0
    %1360 = vmatpush2.msra.mxu0 0.0
    %1361 = vmatprep.subr.mxu0 0.0
    %1362 = vmatpush2.msra.mxu0 0.0
    %1363 = vmatprep.subr.mxu0 0.0
    %1364 = vmatpush2.msra.mxu0 0.0
    %1365 = vmatprep.subr.mxu0 0.0
    %1366 = vmatpush2.msra.mxu0 0.0
    %1367 = vmatprep.subr.mxu0 0.0
    %1368 = vmatpush2.msra.mxu0 0.0
    %1369 = vmatprep.subr.mxu0 0.0
    %1370 = vmatpush2.msra.mxu0 0.0
    %1371 = vmatprep.subr.mxu0 0.0
    %1372 = vmatpush2.msra.mxu0 0.0
    %1373 = vmatprep.subr.mxu0 0.0
    %1374 = vmatpush2.msra.mxu0 0.0
    %1375 = vmatprep.subr.mxu0 0.0
    %1376 = vmatpush2.msra.mxu0 0.0
    %1377 = vmatprep.subr.mxu0 0.0
    %1378 = vmatpush2.msra.mxu0 0.0
    %1379 = vmatprep.subr.mxu0 0.0
    %1380 = vmatpush2.msra.mxu0 0.0
    %1381 = vmatprep.subr.mxu0 0.0
    %1382 = vmatpush2.msra.mxu0 0.0
    %1383 = vmatprep.subr.mxu0 0.0
    %1384 = vmatpush2.msra.mxu0 0.0
    %1385 = vmatprep.subr.mxu0 0.0
    %1386 = vmatpush2.msra.mxu0 0.0
    %1387 = vmatprep.subr.mxu0 0.0
    %1388 = vmatpush2.msra.mxu0 0.0
    %1389 = vmatprep.mubr.f32.mxu0 0.0
    %v1390 = vand.u32 %v909, 4294901760
    %1391 = vmatmul.mubr.f32.gmra.mxu0 %v1390
    %v1392 = vpop.f32.mrf.mxu0
    %v1393 = vadd.f32 %v1318, %v1392
    %v1394 = vpop.f32.mrf.mxu0
    %1395 = vdwg.mxu0
    %v1397 = vrot.slane %v1393, 1
    %v1399 = vmax.f32 %v1393, %v1397
    %v1400 = vlaneseq
    %v1401 = vshrl.u32 %v1400, 7
    %v1402 = vsub.s32 0, %v1401
    %v1403 = vrot.slane %v1399, %v1402
    %v1404 = vsub.f32 %v1393, %v1403
    %v1405 = vmul.f32 %v1404, 1.442695
    %v1406 = vpow.pop %v1405
    %v1408 = vrot.slane %v1406, 1
    %v1410 = vadd.f32 %v1406, %v1408
    %v1411 = vlaneseq
    %v1412 = vshrl.u32 %v1411, 7
    %v1413 = vsub.s32 0, %v1412
    %v1414 = vrot.slane %v1410, %v1413
    %v1415 = vrcp.pop %v1414
    %v1416 = vmul.f32 %v1406, %v1415
    %1417 = vst [vmem:[#allocation2] sm:$0x3] %v1416
    // Predicated region
    $region22: #{tpu_custom_call.1} parent=1 // pred_check
      _
    $region23: #{tpu_custom_call.1} parent=1 // pred_check_branch
      %1419 = sbr.rel (0) target = $region25
    $region24: #{tpu_custom_call.1} parent=1 // pred_region
      %s1421 = ssub.s32 32, 32
      %1422 = vsyncadd [#allocation3], %s1421
      %s1424 = sshll.u32 [#allocation2], 4
      %s1425 = int_to_ptr.vmem [resolvable:$true] %s1424
      %1427 = dma.vmem_to_hbm [thread:$0]  %s1425, 32, %s5, [#allocation3]
    $region25: #{tpu_custom_call.1} parent=1 // pred_fallthru
      _
    // Predicated region
    $region26: #{tpu_custom_call.1} parent=1 // pred_check
      _
    $region27: #{tpu_custom_call.1} parent=1 // pred_check_branch
      %1429 = sbr.rel (0) target = $region29
    $region28: #{tpu_custom_call.1} parent=1 // pred_region
      %1430 = dma.done [#allocation3], 32
    $region29: #{tpu_custom_call.1} parent=1 // pred_fallthru
      _
    %1431 = vsyncpa [#allocation3], 1

</llo_original>
